<compile_context>
chip_gen: v7x
topology: tpu7x:2x2x1
jax: 0.10.0
libtpu: 0.0.40
codegen_flags: <defaults>
</compile_context>

<pallas_src>
import functools

import jax
import jax.numpy as jnp
from jax.experimental import pallas as pl
from jax.experimental.pallas import tpu as pltpu  # noqa: F401  (TPU backend)


# ---------------------------------------------------------------------------
# Fused Pallas kernel: net -> projector -> predictor -> symmetric cosine loss
# ---------------------------------------------------------------------------

def _full_spec(shape):
    # whole-array block resident in VMEM, grid-less invocation
    return pl.BlockSpec(shape, lambda: (0,) * len(shape))


def byol_fused_kernel(
    x_ref,
    net_w_ref, net_b_ref,
    pj_w1_ref, pj_b1_ref, pj_g_ref, pj_be_ref, pj_w2_ref, pj_b2_ref,
    pr_w1_ref, pr_b1_ref, pr_g_ref, pr_be_ref, pr_w2_ref, pr_b2_ref,
    loss_ref,
):
    def linear(a_f32, w_ref, b_ref):
        # bf16 MXU matmul, f32 accumulation, f32 bias add
        return (
            jnp.dot(a_f32.astype(jnp.bfloat16), w_ref[...],
                    preferred_element_type=jnp.float32)
            + b_ref[...]
        )

    def bn_relu(h, g_ref, be_ref):
        # BatchNorm1d in training mode: per-feature biased batch stats, eps=1e-5.
        # Single reduction pass: var = E[h^2] - mean^2 (clamped for rounding).
        mean = jnp.mean(h, axis=0, keepdims=True)
        mean_sq = jnp.mean(h * h, axis=0, keepdims=True)
        var = jnp.maximum(mean_sq - mean * mean, 0.0)
        h_hat = (h - mean) * jax.lax.rsqrt(var + 1e-5)
        h_hat = g_ref[...] * h_hat + be_ref[...]
        return jnp.maximum(h_hat, 0.0)  # ReLU

    def l2_normalize(v):
        # F.normalize(..., p=2, eps=1e-12):  v / max(||v||, 1e-12)
        nsq = jnp.sum(v * v, axis=-1, keepdims=True)
        return v * jax.lax.rsqrt(jnp.maximum(nsq, 1e-24))

    x = x_ref[...].astype(jnp.float32)

    # base net: hooked representation = output of Linear (children[-2])
    rep = linear(x, net_w_ref, net_b_ref)

    # projector MLP: Linear -> BN -> ReLU -> Linear
    proj = linear(bn_relu(linear(rep, pj_w1_ref, pj_b1_ref), pj_g_ref, pj_be_ref),
                  pj_w2_ref, pj_b2_ref)

    # predictor MLP: Linear -> BN -> ReLU -> Linear
    pred = linear(bn_relu(linear(proj, pr_w1_ref, pr_b1_ref), pr_g_ref, pr_be_ref),
                  pr_w2_ref, pr_b2_ref)

    # Target projections == online projections (deepcopy at init + identity augments),
    # and both views are identical, so:
    #   loss = mean(loss_one + loss_two) = 2 * mean(2 - 2 * cos(pred, proj))
    p = l2_normalize(pred)
    t = l2_normalize(proj)
    per_sample = 2.0 - 2.0 * jnp.sum(p * t, axis=-1, keepdims=True)  # (B, 1)
    loss_ref[...] = jnp.full((1, 1), 2.0 * jnp.mean(per_sample), jnp.float32)


def byol_forward_fused(x, params):
    args = (
        x,
        params["net_w"], params["net_b"],
        params["proj_w1"], params["proj_b1"], params["proj_g"], params["proj_beta"],
        params["proj_w2"], params["proj_b2"],
        params["pred_w1"], params["pred_b1"], params["pred_g"], params["pred_beta"],
        params["pred_w2"], params["pred_b2"],
    )
    loss = pl.pallas_call(
        byol_fused_kernel,
        out_shape=jax.ShapeDtypeStruct((1, 1), jnp.float32),
        in_specs=[_full_spec(a.shape) for a in args],
        out_specs=_full_spec((1, 1)),
    )(*args)
    return loss[0, 0]


# ---------------------------------------------------------------------------
# Parameter init (deterministic, PyTorch-style uniform(-1/sqrt(fan_in), ...))
# Weights stored in bf16 (MXU inputs); biases / BN affine params stay f32.
# ---------------------------------------------------------------------------

def _linear_init(key, fan_in, fan_out):
    kw, kb = jax.random.split(key)
    bound = 1.0 / jnp.sqrt(float(fan_in))
    w = jax.random.uniform(kw, (fan_in, fan_out), jnp.float32, -bound, bound)
    b = jax.random.uniform(kb, (1, fan_out), jnp.float32, -bound, bound)
    return w.astype(jnp.bfloat16), b


def init_byol_params(key, d_in, repr_dim, hidden, proj):
    ks = jax.random.split(key, 5)
    p = {}
    # base net: Linear(d_in, repr_dim)  (children[-2] is the hooked layer)
    p["net_w"], p["net_b"] = _linear_init(ks[0], d_in, repr_dim)
    # projector MLP(repr_dim -> hidden -> proj)
    p["proj_w1"], p["proj_b1"] = _linear_init(ks[1], repr_dim, hidden)
    p["proj_g"] = jnp.ones((1, hidden), jnp.float32)
    p["proj_beta"] = jnp.zeros((1, hidden), jnp.float32)
    p["proj_w2"], p["proj_b2"] = _linear_init(ks[2], hidden, proj)
    # online predictor MLP(proj -> hidden -> proj)
    p["pred_w1"], p["pred_b1"] = _linear_init(ks[3], proj, hidden)
    p["pred_g"] = jnp.ones((1, hidden), jnp.float32)
    p["pred_beta"] = jnp.zeros((1, hidden), jnp.float32)
    p["pred_w2"], p["pred_b2"] = _linear_init(ks[4], hidden, proj)
    return p


# ---------------------------------------------------------------------------
# BYOL forward (jitted wrapper around the single fused kernel)
# ---------------------------------------------------------------------------

@functools.partial(jax.jit, static_argnames=())
def byol_forward(x, params):
    # augment1(x) == augment2(x) == x (identity, see TODO at top), and the target
    # encoder is an exact deepcopy at init, so the full symmetric BYOL loss reduces
    # to a single encoder/predictor pass on the B-row batch (see kernel docstring).
    # BatchNorm note: stats over the original duplicated 2B batch equal stats over
    # this B-row batch because both halves are identical.
    return byol_forward_fused(x, params)


if __name__ == "__main__":
    # small, lane-dense shapes consistent with BYOL.__init__(net, image_size, batch_size, ...)
    batch_size = 8                  # > 1 required by BatchNorm in training mode
    image_size = 128                # D_in
    repr_dim = 128                  # base-net hidden representation dim
    projection_hidden_size = 256    # (stand-in for 4096)
    projection_size = 128           # (stand-in for 256)

    key = jax.random.PRNGKey(0)
    k_param, k_x = jax.random.split(key)
    params = init_byol_params(k_param, image_size, repr_dim,
                              projection_hidden_size, projection_size)
    x = jax.random.normal(k_x, (batch_size, image_size), jnp.float32)

    loss = byol_forward(x, params)
    jax.block_until_ready(loss)
    assert loss.shape == () and jnp.isfinite(loss)
    print("KERNEL_OK")
</pallas_src>

<mosaic_0001>
module attributes {stable_mosaic.version = 11 : i64} {
  func.func @byol_fused_kernel(%arg0: memref<8x128xf32, #tpu.memory_space<vmem>>, %arg1: memref<128x128xbf16, #tpu.memory_space<vmem>>, %arg2: memref<1x128xf32, #tpu.memory_space<vmem>>, %arg3: memref<128x256xbf16, #tpu.memory_space<vmem>>, %arg4: memref<1x256xf32, #tpu.memory_space<vmem>>, %arg5: memref<1x256xf32, #tpu.memory_space<vmem>>, %arg6: memref<1x256xf32, #tpu.memory_space<vmem>>, %arg7: memref<256x128xbf16, #tpu.memory_space<vmem>>, %arg8: memref<1x128xf32, #tpu.memory_space<vmem>>, %arg9: memref<128x256xbf16, #tpu.memory_space<vmem>>, %arg10: memref<1x256xf32, #tpu.memory_space<vmem>>, %arg11: memref<1x256xf32, #tpu.memory_space<vmem>>, %arg12: memref<1x256xf32, #tpu.memory_space<vmem>>, %arg13: memref<256x128xbf16, #tpu.memory_space<vmem>>, %arg14: memref<1x128xf32, #tpu.memory_space<vmem>>, %arg15: memref<1x1xf32, #tpu.memory_space<vmem>>) attributes {dimension_semantics = [], scalar_prefetch = 0 : i64, scratch_operands = 0 : i64, tpu.core_type = #tpu.core_type<tc>} {
    %c0 = arith.constant 0 : index
    %c0_0 = arith.constant 0 : index
    %0 = vector.load %arg0[%c0, %c0_0] : memref<8x128xf32, #tpu.memory_space<vmem>>, vector<8x128xf32>
    %1 = arith.truncf %0 : vector<8x128xf32> to vector<8x128xbf16>
    %c0_1 = arith.constant 0 : index
    %c0_2 = arith.constant 0 : index
    %2 = vector.load %arg1[%c0_1, %c0_2] : memref<128x128xbf16, #tpu.memory_space<vmem>>, vector<128x128xbf16>
    %cst = arith.constant dense<0.000000e+00> : vector<8x128xf32>
    %3 = tpu.matmul %1, %2, %cst {dimension_numbers = #tpu.dot_dimension_numbers<[1], [0], [0], [1], [0, 0, 1, 1], [], []>} : vector<8x128xbf16>, vector<128x128xbf16>, vector<8x128xf32> -> vector<8x128xf32>
    %c0_3 = arith.constant 0 : index
    %c0_4 = arith.constant 0 : index
    %4 = vector.load %arg2[%c0_3, %c0_4] : memref<1x128xf32, #tpu.memory_space<vmem>>, vector<1x128xf32>
    %5 = vector.broadcast %4 : vector<1x128xf32> to vector<8x128xf32>
    %6 = arith.addf %3, %5 : vector<8x128xf32>
    %7 = arith.truncf %6 : vector<8x128xf32> to vector<8x128xbf16>
    %c0_5 = arith.constant 0 : index
    %c0_6 = arith.constant 0 : index
    %8 = vector.load %arg3[%c0_5, %c0_6] : memref<128x256xbf16, #tpu.memory_space<vmem>>, vector<128x256xbf16>
    %cst_7 = arith.constant dense<0.000000e+00> : vector<8x256xf32>
    %9 = tpu.matmul %7, %8, %cst_7 {dimension_numbers = #tpu.dot_dimension_numbers<[1], [0], [0], [1], [0, 0, 1, 1], [], []>} : vector<8x128xbf16>, vector<128x256xbf16>, vector<8x256xf32> -> vector<8x256xf32>
    %c0_8 = arith.constant 0 : index
    %c0_9 = arith.constant 0 : index
    %10 = vector.load %arg4[%c0_8, %c0_9] : memref<1x256xf32, #tpu.memory_space<vmem>>, vector<1x256xf32>
    %11 = vector.broadcast %10 : vector<1x256xf32> to vector<8x256xf32>
    %12 = arith.addf %9, %11 : vector<8x256xf32>
    %cst_10 = arith.constant dense<0.000000e+00> : vector<256xf32>
    %13 = vector.multi_reduction <add>, %12, %cst_10 [0] : vector<8x256xf32> to vector<256xf32>
    %14 = vector.shape_cast %13 : vector<256xf32> to vector<1x256xf32>
    %cst_11 = arith.constant 8.000000e+00 : f32
    %15 = vector.broadcast %cst_11 : f32 to vector<1x256xf32>
    %16 = arith.divf %14, %15 : vector<1x256xf32>
    %17 = arith.mulf %12, %12 : vector<8x256xf32>
    %cst_12 = arith.constant dense<0.000000e+00> : vector<256xf32>
    %18 = vector.multi_reduction <add>, %17, %cst_12 [0] : vector<8x256xf32> to vector<256xf32>
    %19 = vector.shape_cast %18 : vector<256xf32> to vector<1x256xf32>
    %cst_13 = arith.constant 8.000000e+00 : f32
    %20 = vector.broadcast %cst_13 : f32 to vector<1x256xf32>
    %21 = arith.divf %19, %20 : vector<1x256xf32>
    %22 = arith.mulf %16, %16 : vector<1x256xf32>
    %23 = arith.subf %21, %22 : vector<1x256xf32>
    %cst_14 = arith.constant 0.000000e+00 : f32
    %24 = vector.broadcast %cst_14 : f32 to vector<1x256xf32>
    %25 = arith.maximumf %23, %24 : vector<1x256xf32>
    %26 = vector.broadcast %16 : vector<1x256xf32> to vector<8x256xf32>
    %27 = arith.subf %12, %26 : vector<8x256xf32>
    %cst_15 = arith.constant 9.99999974E-6 : f32
    %28 = vector.broadcast %cst_15 : f32 to vector<1x256xf32>
    %29 = arith.addf %25, %28 : vector<1x256xf32>
    %30 = math.rsqrt %29 : vector<1x256xf32>
    %31 = vector.broadcast %30 : vector<1x256xf32> to vector<8x256xf32>
    %32 = arith.mulf %27, %31 : vector<8x256xf32>
    %c0_16 = arith.constant 0 : index
    %c0_17 = arith.constant 0 : index
    %33 = vector.load %arg5[%c0_16, %c0_17] : memref<1x256xf32, #tpu.memory_space<vmem>>, vector<1x256xf32>
    %34 = vector.broadcast %33 : vector<1x256xf32> to vector<8x256xf32>
    %35 = arith.mulf %34, %32 : vector<8x256xf32>
    %c0_18 = arith.constant 0 : index
    %c0_19 = arith.constant 0 : index
    %36 = vector.load %arg6[%c0_18, %c0_19] : memref<1x256xf32, #tpu.memory_space<vmem>>, vector<1x256xf32>
    %37 = vector.broadcast %36 : vector<1x256xf32> to vector<8x256xf32>
    %38 = arith.addf %35, %37 : vector<8x256xf32>
    %cst_20 = arith.constant 0.000000e+00 : f32
    %39 = vector.broadcast %cst_20 : f32 to vector<8x256xf32>
    %40 = arith.maximumf %38, %39 : vector<8x256xf32>
    %41 = arith.truncf %40 : vector<8x256xf32> to vector<8x256xbf16>
    %c0_21 = arith.constant 0 : index
    %c0_22 = arith.constant 0 : index
    %42 = vector.load %arg7[%c0_21, %c0_22] : memref<256x128xbf16, #tpu.memory_space<vmem>>, vector<256x128xbf16>
    %cst_23 = arith.constant dense<0.000000e+00> : vector<8x128xf32>
    %43 = tpu.matmul %41, %42, %cst_23 {dimension_numbers = #tpu.dot_dimension_numbers<[1], [0], [0], [1], [0, 0, 1, 1], [], []>} : vector<8x256xbf16>, vector<256x128xbf16>, vector<8x128xf32> -> vector<8x128xf32>
    %c0_24 = arith.constant 0 : index
    %c0_25 = arith.constant 0 : index
    %44 = vector.load %arg8[%c0_24, %c0_25] : memref<1x128xf32, #tpu.memory_space<vmem>>, vector<1x128xf32>
    %45 = vector.broadcast %44 : vector<1x128xf32> to vector<8x128xf32>
    %46 = arith.addf %43, %45 : vector<8x128xf32>
    %47 = arith.truncf %46 : vector<8x128xf32> to vector<8x128xbf16>
    %c0_26 = arith.constant 0 : index
    %c0_27 = arith.constant 0 : index
    %48 = vector.load %arg9[%c0_26, %c0_27] : memref<128x256xbf16, #tpu.memory_space<vmem>>, vector<128x256xbf16>
    %cst_28 = arith.constant dense<0.000000e+00> : vector<8x256xf32>
    %49 = tpu.matmul %47, %48, %cst_28 {dimension_numbers = #tpu.dot_dimension_numbers<[1], [0], [0], [1], [0, 0, 1, 1], [], []>} : vector<8x128xbf16>, vector<128x256xbf16>, vector<8x256xf32> -> vector<8x256xf32>
    %c0_29 = arith.constant 0 : index
    %c0_30 = arith.constant 0 : index
    %50 = vector.load %arg10[%c0_29, %c0_30] : memref<1x256xf32, #tpu.memory_space<vmem>>, vector<1x256xf32>
    %51 = vector.broadcast %50 : vector<1x256xf32> to vector<8x256xf32>
    %52 = arith.addf %49, %51 : vector<8x256xf32>
    %cst_31 = arith.constant dense<0.000000e+00> : vector<256xf32>
    %53 = vector.multi_reduction <add>, %52, %cst_31 [0] : vector<8x256xf32> to vector<256xf32>
    %54 = vector.shape_cast %53 : vector<256xf32> to vector<1x256xf32>
    %cst_32 = arith.constant 8.000000e+00 : f32
    %55 = vector.broadcast %cst_32 : f32 to vector<1x256xf32>
    %56 = arith.divf %54, %55 : vector<1x256xf32>
    %57 = arith.mulf %52, %52 : vector<8x256xf32>
    %cst_33 = arith.constant dense<0.000000e+00> : vector<256xf32>
    %58 = vector.multi_reduction <add>, %57, %cst_33 [0] : vector<8x256xf32> to vector<256xf32>
    %59 = vector.shape_cast %58 : vector<256xf32> to vector<1x256xf32>
    %cst_34 = arith.constant 8.000000e+00 : f32
    %60 = vector.broadcast %cst_34 : f32 to vector<1x256xf32>
    %61 = arith.divf %59, %60 : vector<1x256xf32>
    %62 = arith.mulf %56, %56 : vector<1x256xf32>
    %63 = arith.subf %61, %62 : vector<1x256xf32>
    %cst_35 = arith.constant 0.000000e+00 : f32
    %64 = vector.broadcast %cst_35 : f32 to vector<1x256xf32>
    %65 = arith.maximumf %63, %64 : vector<1x256xf32>
    %66 = vector.broadcast %56 : vector<1x256xf32> to vector<8x256xf32>
    %67 = arith.subf %52, %66 : vector<8x256xf32>
    %cst_36 = arith.constant 9.99999974E-6 : f32
    %68 = vector.broadcast %cst_36 : f32 to vector<1x256xf32>
    %69 = arith.addf %65, %68 : vector<1x256xf32>
    %70 = math.rsqrt %69 : vector<1x256xf32>
    %71 = vector.broadcast %70 : vector<1x256xf32> to vector<8x256xf32>
    %72 = arith.mulf %67, %71 : vector<8x256xf32>
    %c0_37 = arith.constant 0 : index
    %c0_38 = arith.constant 0 : index
    %73 = vector.load %arg11[%c0_37, %c0_38] : memref<1x256xf32, #tpu.memory_space<vmem>>, vector<1x256xf32>
    %74 = vector.broadcast %73 : vector<1x256xf32> to vector<8x256xf32>
    %75 = arith.mulf %74, %72 : vector<8x256xf32>
    %c0_39 = arith.constant 0 : index
    %c0_40 = arith.constant 0 : index
    %76 = vector.load %arg12[%c0_39, %c0_40] : memref<1x256xf32, #tpu.memory_space<vmem>>, vector<1x256xf32>
    %77 = vector.broadcast %76 : vector<1x256xf32> to vector<8x256xf32>
    %78 = arith.addf %75, %77 : vector<8x256xf32>
    %cst_41 = arith.constant 0.000000e+00 : f32
    %79 = vector.broadcast %cst_41 : f32 to vector<8x256xf32>
    %80 = arith.maximumf %78, %79 : vector<8x256xf32>
    %81 = arith.truncf %80 : vector<8x256xf32> to vector<8x256xbf16>
    %c0_42 = arith.constant 0 : index
    %c0_43 = arith.constant 0 : index
    %82 = vector.load %arg13[%c0_42, %c0_43] : memref<256x128xbf16, #tpu.memory_space<vmem>>, vector<256x128xbf16>
    %cst_44 = arith.constant dense<0.000000e+00> : vector<8x128xf32>
    %83 = tpu.matmul %81, %82, %cst_44 {dimension_numbers = #tpu.dot_dimension_numbers<[1], [0], [0], [1], [0, 0, 1, 1], [], []>} : vector<8x256xbf16>, vector<256x128xbf16>, vector<8x128xf32> -> vector<8x128xf32>
    %c0_45 = arith.constant 0 : index
    %c0_46 = arith.constant 0 : index
    %84 = vector.load %arg14[%c0_45, %c0_46] : memref<1x128xf32, #tpu.memory_space<vmem>>, vector<1x128xf32>
    %85 = vector.broadcast %84 : vector<1x128xf32> to vector<8x128xf32>
    %86 = arith.addf %83, %85 : vector<8x128xf32>
    %87 = arith.mulf %86, %86 : vector<8x128xf32>
    %cst_47 = arith.constant dense<0.000000e+00> : vector<8xf32>
    %88 = vector.multi_reduction <add>, %87, %cst_47 [1] : vector<8x128xf32> to vector<8xf32>
    %89 = vector.shape_cast %88 : vector<8xf32> to vector<8x1xf32>
    %cst_48 = arith.constant 1.000000e-24 : f32
    %90 = vector.broadcast %cst_48 : f32 to vector<8x1xf32>
    %91 = arith.maximumf %89, %90 : vector<8x1xf32>
    %92 = math.rsqrt %91 : vector<8x1xf32>
    %93 = vector.broadcast %92 : vector<8x1xf32> to vector<8x128xf32>
    %94 = arith.mulf %86, %93 : vector<8x128xf32>
    %95 = arith.mulf %46, %46 : vector<8x128xf32>
    %cst_49 = arith.constant dense<0.000000e+00> : vector<8xf32>
    %96 = vector.multi_reduction <add>, %95, %cst_49 [1] : vector<8x128xf32> to vector<8xf32>
    %97 = vector.shape_cast %96 : vector<8xf32> to vector<8x1xf32>
    %cst_50 = arith.constant 1.000000e-24 : f32
    %98 = vector.broadcast %cst_50 : f32 to vector<8x1xf32>
    %99 = arith.maximumf %97, %98 : vector<8x1xf32>
    %100 = math.rsqrt %99 : vector<8x1xf32>
    %101 = vector.broadcast %100 : vector<8x1xf32> to vector<8x128xf32>
    %102 = arith.mulf %46, %101 : vector<8x128xf32>
    %103 = arith.mulf %94, %102 : vector<8x128xf32>
    %cst_51 = arith.constant dense<0.000000e+00> : vector<8xf32>
    %104 = vector.multi_reduction <add>, %103, %cst_51 [1] : vector<8x128xf32> to vector<8xf32>
    %105 = vector.shape_cast %104 : vector<8xf32> to vector<8x1xf32>
    %cst_52 = arith.constant 2.000000e+00 : f32
    %106 = vector.broadcast %cst_52 : f32 to vector<8x1xf32>
    %107 = arith.mulf %106, %105 : vector<8x1xf32>
    %cst_53 = arith.constant 2.000000e+00 : f32
    %108 = vector.broadcast %cst_53 : f32 to vector<8x1xf32>
    %109 = arith.subf %108, %107 : vector<8x1xf32>
    %110 = vector.shape_cast %109 : vector<8x1xf32> to vector<1x8x1xf32>
    %cst_54 = arith.constant dense<0.000000e+00> : vector<1xf32>
    %111 = vector.multi_reduction <add>, %110, %cst_54 [1, 2] : vector<1x8x1xf32> to vector<1xf32>
    %112 = vector.shape_cast %111 : vector<1xf32> to vector<1x1x1xf32>
    %113 = vector.extract %112[0, 0, 0] : f32 from vector<1x1x1xf32>
    %cst_55 = arith.constant 8.000000e+00 : f32
    %114 = arith.divf %113, %cst_55 : f32
    %cst_56 = arith.constant 2.000000e+00 : f32
    %115 = arith.mulf %cst_56, %114 : f32
    %116 = vector.broadcast %115 : f32 to vector<1x1xf32>
    %c0_57 = arith.constant 0 : index
    %c0_58 = arith.constant 0 : index
    %117 = vector.load %arg15[%c0_57, %c0_58] : memref<1x1xf32, #tpu.memory_space<vmem>>, vector<1x1xf32>
    tpu.vector_store %arg15[%c0_57, %c0_58], %116 {strides = array<i32>} : memref<1x1xf32, #tpu.memory_space<vmem>>, vector<1x1xf32>,
    return
  }
}

</mosaic_0001>

<llo_original>
// kernel: byol_forward.1
$region0: #{byol_forward.1}
  #allocation0 [shape = 'u32[]', space=smem, size = 0x4, offset = 0x4, fixed_abs, tag = 'smem constant byte address 0x4 - core index']
  #allocation1 [shape = 'u32[144,128]{1,0:T(1,128)}', space=vmem, size = 0x12000, scoped, tag = 'internal scratch']
  %s0 = inlined_call_operand.hbm [shape: f32[8,128], index: 0, kind: input, shape index: {}]
  %s1 = inlined_call_operand.hbm [shape: bf16[128,128], index: 1, kind: input, shape index: {}]
  %s2 = inlined_call_operand.vmem [shape: f32[1,128], index: 2, kind: input, shape index: {}]
  %s3 = inlined_call_operand.hbm [shape: bf16[128,256], index: 3, kind: input, shape index: {}]
  %s4 = inlined_call_operand.vmem [shape: f32[1,256], index: 4, kind: input, shape index: {}]
  %s5 = inlined_call_operand.vmem [shape: f32[1,256], index: 5, kind: input, shape index: {}]
  %s6 = inlined_call_operand.vmem [shape: f32[1,256], index: 6, kind: input, shape index: {}]
  %s7 = inlined_call_operand.hbm [shape: bf16[256,128], index: 7, kind: input, shape index: {}]
  %s8 = inlined_call_operand.vmem [shape: f32[1,128], index: 8, kind: input, shape index: {}]
  %s9 = inlined_call_operand.hbm [shape: bf16[128,256], index: 9, kind: input, shape index: {}]
  %s10 = inlined_call_operand.vmem [shape: f32[1,256], index: 10, kind: input, shape index: {}]
  %s11 = inlined_call_operand.vmem [shape: f32[1,256], index: 11, kind: input, shape index: {}]
  %s12 = inlined_call_operand.vmem [shape: f32[1,256], index: 12, kind: input, shape index: {}]
  %s13 = inlined_call_operand.hbm [shape: bf16[256,128], index: 13, kind: input, shape index: {}]
  %s14 = inlined_call_operand.vmem [shape: f32[1,128], index: 14, kind: input, shape index: {}]
  %s15 = inlined_call_operand.hbm [shape: f32[1,1], index: 15, kind: output, shape index: {}]
  %s16 = sld [smem:[#allocation0]]
  $region94: #{byol_forward.1} parent=0
    _
  %s18 = ssub.s32 1, %s16
  %s19 = scalar_select 0, %s18, %s16
  $region1: #{byol_forward.1} parent=0
    #allocation2 [shape = 'u8[4096]{0}', space=vmem, size = 0x1000, scoped, tag = 'input window, operand 0, single buffered']
    #allocation3 [shape = 's32[1]{0}', space=sflag, size = 0x4, scoped, tag = 'scoped memory for byol_forward.1']
    #allocation4 [shape = 's32[1]{0}', space=sflag, size = 0x4, scoped, tag = 'scoped memory for byol_forward.1']
    #allocation5 [shape = 'u8[32768]{0}', space=vmem, size = 0x8000, scoped, tag = 'input window, operand 1, single buffered']
    #allocation6 [shape = 's32[1]{0}', space=sflag, size = 0x4, scoped, tag = 'scoped memory for byol_forward.1']
    #allocation7 [shape = 'u8[65536]{0}', space=vmem, size = 0x10000, scoped, tag = 'input window, operand 3, single buffered']
    #allocation8 [shape = 'u8[65536]{0}', space=vmem, size = 0x10000, scoped, tag = 'input window, operand 7, single buffered']
    #allocation9 [shape = 's32[1]{0}', space=sflag, size = 0x4, scoped, tag = 'scoped memory for byol_forward.1']
    #allocation10 [shape = 'u8[65536]{0}', space=vmem, size = 0x10000, scoped, tag = 'input window, operand 9, single buffered']
    #allocation11 [shape = 'u8[65536]{0}', space=vmem, size = 0x10000, scoped, tag = 'input window, operand 13, single buffered']
    #allocation12 [shape = 's32[1]{0}', space=sflag, size = 0x4, scoped, tag = 'scoped memory for byol_forward.1']
    #allocation13 [shape = 'u8[512]{0}', space=vmem, size = 0x400, scoped, tag = 'output window, operand 0, single buffered']
    %20 = vsyncpa [#allocation3], 0
    %21 = vsyncpa [#allocation6], 0
    %22 = vsyncpa [#allocation9], 0
    %23 = vsyncpa [#allocation12], 0
    %24 = vsyncpa [#allocation4], 0
    // Predicated region
    $region2: #{byol_forward.1} parent=1 // pred_check
      _
    $region3: #{byol_forward.1} parent=1 // pred_check_branch
      %26 = sbr.rel (0) target = $region5
    $region4: #{byol_forward.1} parent=1 // pred_region
      %s28 = ssub.s32 128, 128
      %29 = vsyncadd [#allocation3], %s28
      %s31 = sshll.u32 [#allocation2], 4
      %s32 = int_to_ptr.vmem [resolvable:$true] %s31
      %34 = dma.hbm_to_vmem [thread:$0]  %s0, 128, %s32, [#allocation3]
    $region5: #{byol_forward.1} parent=1 // pred_fallthru
      _
    // Predicated region
    $region6: #{byol_forward.1} parent=1 // pred_check
      _
    $region7: #{byol_forward.1} parent=1 // pred_check_branch
      %36 = sbr.rel (0) target = $region9
    $region8: #{byol_forward.1} parent=1 // pred_region
      %s38 = ssub.s32 1024, 1024
      %39 = vsyncadd [#allocation6], %s38
      %s40 = sshll.u32 [#allocation5], 4
      %s41 = int_to_ptr.vmem [resolvable:$true] %s40
      %46 = dma.hbm_to_vmem [thread:$0]  %s1, 1024, %s41, [#allocation6], 64, 64, 4
    $region9: #{byol_forward.1} parent=1 // pred_fallthru
      _
    // Predicated region
    $region10: #{byol_forward.1} parent=1 // pred_check
      _
    $region11: #{byol_forward.1} parent=1 // pred_check_branch
      %48 = sbr.rel (0) target = $region13
    $region12: #{byol_forward.1} parent=1 // pred_region
      _
    $region13: #{byol_forward.1} parent=1 // pred_fallthru
      _
    // Predicated region
    $region14: #{byol_forward.1} parent=1 // pred_check
      _
    $region15: #{byol_forward.1} parent=1 // pred_check_branch
      %50 = sbr.rel (0) target = $region17
    $region16: #{byol_forward.1} parent=1 // pred_region
      %s52 = ssub.s32 2048, 2048
      %53 = vsyncadd [#allocation6], %s52
      %s54 = sshll.u32 [#allocation7], 4
      %s55 = int_to_ptr.vmem [resolvable:$true] %s54
      %60 = dma.hbm_to_vmem [thread:$0]  %s3, 2048, %s55, [#allocation6], 128, 128, 8
    $region17: #{byol_forward.1} parent=1 // pred_fallthru
      _
    // Predicated region
    $region18: #{byol_forward.1} parent=1 // pred_check
      _
    $region19: #{byol_forward.1} parent=1 // pred_check_branch
      %62 = sbr.rel (0) target = $region21
    $region20: #{byol_forward.1} parent=1 // pred_region
      _
    $region21: #{byol_forward.1} parent=1 // pred_fallthru
      _
    // Predicated region
    $region22: #{byol_forward.1} parent=1 // pred_check
      _
    $region23: #{byol_forward.1} parent=1 // pred_check_branch
      %64 = sbr.rel (0) target = $region25
    $region24: #{byol_forward.1} parent=1 // pred_region
      _
    $region25: #{byol_forward.1} parent=1 // pred_fallthru
      _
    // Predicated region
    $region26: #{byol_forward.1} parent=1 // pred_check
      _
    $region27: #{byol_forward.1} parent=1 // pred_check_branch
      %66 = sbr.rel (0) target = $region29
    $region28: #{byol_forward.1} parent=1 // pred_region
      _
    $region29: #{byol_forward.1} parent=1 // pred_fallthru
      _
    // Predicated region
    $region30: #{byol_forward.1} parent=1 // pred_check
      _
    $region31: #{byol_forward.1} parent=1 // pred_check_branch
      %68 = sbr.rel (0) target = $region33
    $region32: #{byol_forward.1} parent=1 // pred_region
      %s70 = ssub.s32 2048, 2048
      %71 = vsyncadd [#allocation9], %s70
      %s72 = sshll.u32 [#allocation8], 4
      %s73 = int_to_ptr.vmem [resolvable:$true] %s72
      %78 = dma.hbm_to_vmem [thread:$0]  %s7, 2048, %s73, [#allocation9], 64, 64, 4
    $region33: #{byol_forward.1} parent=1 // pred_fallthru
      _
    // Predicated region
    $region34: #{byol_forward.1} parent=1 // pred_check
      _
    $region35: #{byol_forward.1} parent=1 // pred_check_branch
      %80 = sbr.rel (0) target = $region37
    $region36: #{byol_forward.1} parent=1 // pred_region
      _
    $region37: #{byol_forward.1} parent=1 // pred_fallthru
      _
    // Predicated region
    $region38: #{byol_forward.1} parent=1 // pred_check
      _
    $region39: #{byol_forward.1} parent=1 // pred_check_branch
      %82 = sbr.rel (0) target = $region41
    $region40: #{byol_forward.1} parent=1 // pred_region
      %s84 = ssub.s32 2048, 2048
      %85 = vsyncadd [#allocation9], %s84
      %s86 = sshll.u32 [#allocation10], 4
      %s87 = int_to_ptr.vmem [resolvable:$true] %s86
      %92 = dma.hbm_to_vmem [thread:$0]  %s9, 2048, %s87, [#allocation9], 128, 128, 8
    $region41: #{byol_forward.1} parent=1 // pred_fallthru
      _
    // Predicated region
    $region42: #{byol_forward.1} parent=1 // pred_check
      _
    $region43: #{byol_forward.1} parent=1 // pred_check_branch
      %94 = sbr.rel (0) target = $region45
    $region44: #{byol_forward.1} parent=1 // pred_region
      _
    $region45: #{byol_forward.1} parent=1 // pred_fallthru
      _
    // Predicated region
    $region46: #{byol_forward.1} parent=1 // pred_check
      _
    $region47: #{byol_forward.1} parent=1 // pred_check_branch
      %96 = sbr.rel (0) target = $region49
    $region48: #{byol_forward.1} parent=1 // pred_region
      _
    $region49: #{byol_forward.1} parent=1 // pred_fallthru
      _
    // Predicated region
    $region50: #{byol_forward.1} parent=1 // pred_check
      _
    $region51: #{byol_forward.1} parent=1 // pred_check_branch
      %98 = sbr.rel (0) target = $region53
    $region52: #{byol_forward.1} parent=1 // pred_region
      _
    $region53: #{byol_forward.1} parent=1 // pred_fallthru
      _
    // Predicated region
    $region54: #{byol_forward.1} parent=1 // pred_check
      _
    $region55: #{byol_forward.1} parent=1 // pred_check_branch
      %100 = sbr.rel (0) target = $region57
    $region56: #{byol_forward.1} parent=1 // pred_region
      %s102 = ssub.s32 2048, 2048
      %103 = vsyncadd [#allocation12], %s102
      %s104 = sshll.u32 [#allocation11], 4
      %s105 = int_to_ptr.vmem [resolvable:$true] %s104
      %110 = dma.hbm_to_vmem [thread:$0]  %s13, 2048, %s105, [#allocation12], 64, 64, 4
    $region57: #{byol_forward.1} parent=1 // pred_fallthru
      _
    // Predicated region
    $region58: #{byol_forward.1} parent=1 // pred_check
      _
    $region59: #{byol_forward.1} parent=1 // pred_check_branch
      %112 = sbr.rel (0) target = $region61
    $region60: #{byol_forward.1} parent=1 // pred_region
      _
    $region61: #{byol_forward.1} parent=1 // pred_fallthru
      _
    // Predicated region
    $region62: #{byol_forward.1} parent=1 // pred_check
      _
    $region63: #{byol_forward.1} parent=1 // pred_check_branch
      %114 = sbr.rel (0) target = $region65
    $region64: #{byol_forward.1} parent=1 // pred_region
      %115 = dma.done [#allocation3], 128
    $region65: #{byol_forward.1} parent=1 // pred_fallthru
      _
    // Predicated region
    $region66: #{byol_forward.1} parent=1 // pred_check
      _
    $region67: #{byol_forward.1} parent=1 // pred_check_branch
      %117 = sbr.rel (0) target = $region69
    $region68: #{byol_forward.1} parent=1 // pred_region
      %118 = dma.done [#allocation6], 1024
    $region69: #{byol_forward.1} parent=1 // pred_fallthru
      _
    // Predicated region
    $region70: #{byol_forward.1} parent=1 // pred_check
      _
    $region71: #{byol_forward.1} parent=1 // pred_check_branch
      %120 = sbr.rel (0) target = $region73
    $region72: #{byol_forward.1} parent=1 // pred_region
      %121 = dma.done [#allocation6], 2048
    $region73: #{byol_forward.1} parent=1 // pred_fallthru
      _
    // Predicated region
    $region74: #{byol_forward.1} parent=1 // pred_check
      _
    $region75: #{byol_forward.1} parent=1 // pred_check_branch
      %123 = sbr.rel (0) target = $region77
    $region76: #{byol_forward.1} parent=1 // pred_region
      %124 = dma.done [#allocation9], 2048
    $region77: #{byol_forward.1} parent=1 // pred_fallthru
      _
    // Predicated region
    $region78: #{byol_forward.1} parent=1 // pred_check
      _
    $region79: #{byol_forward.1} parent=1 // pred_check_branch
      %126 = sbr.rel (0) target = $region81
    $region80: #{byol_forward.1} parent=1 // pred_region
      %127 = dma.done [#allocation9], 2048
    $region81: #{byol_forward.1} parent=1 // pred_fallthru
      _
    // Predicated region
    $region82: #{byol_forward.1} parent=1 // pred_check
      _
    $region83: #{byol_forward.1} parent=1 // pred_check_branch
      %129 = sbr.rel (0) target = $region85
    $region84: #{byol_forward.1} parent=1 // pred_region
      %130 = dma.done [#allocation12], 2048
    $region85: #{byol_forward.1} parent=1 // pred_fallthru
      _
    %v132 = vld [vmem:[#allocation2] sm:$0xff]
    %v133 = vpack.c.bf16 %v132, %v132
    %v134 = vld [vmem:[#allocation5] sm:$0xf]
    %v135 = vld [vmem:[#allocation5 + $0x4] sm:$0xf]
    %v136 = vld [vmem:[#allocation5 + $0x8] sm:$0xf]
    %v137 = vld [vmem:[#allocation5 + $0xc] sm:$0xf]
    %v138 = vld [vmem:[#allocation5 + $0x10] sm:$0xf]
    %v139 = vld [vmem:[#allocation5 + $0x14] sm:$0xf]
    %v140 = vld [vmem:[#allocation5 + $0x18] sm:$0xf]
    %v141 = vld [vmem:[#allocation5 + $0x1c] sm:$0xf]
    %v142 = vld [vmem:[#allocation5 + $0x20] sm:$0xf]
    %v143 = vld [vmem:[#allocation5 + $0x24] sm:$0xf]
    %v144 = vld [vmem:[#allocation5 + $0x28] sm:$0xf]
    %v145 = vld [vmem:[#allocation5 + $0x2c] sm:$0xf]
    %v146 = vld [vmem:[#allocation5 + $0x30] sm:$0xf]
    %v147 = vld [vmem:[#allocation5 + $0x34] sm:$0xf]
    %v148 = vld [vmem:[#allocation5 + $0x38] sm:$0xf]
    %v149 = vld [vmem:[#allocation5 + $0x3c] sm:$0xf]
    %v150 = vld [vmem:[%s2] sm:$0x1]
    %v152 = vlaneseq
    %v153 = vshrl.u32 %v152, 7
    %v154 = vsub.s32 0, %v153
    %v155 = vrot.slane %v150, %v154
    %v173 = vunpack.c.l.b16 %v134
    %v174 = vunpack.c.l.b16 %v135
    %v175 = vunpack.c.l.b16 %v136
    %v176 = vunpack.c.l.b16 %v137
    %v177 = vunpack.c.l.b16 %v138
    %v178 = vunpack.c.l.b16 %v139
    %v179 = vunpack.c.l.b16 %v140
    %v180 = vunpack.c.l.b16 %v141
    %v181 = vunpack.c.l.b16 %v142
    %v182 = vunpack.c.l.b16 %v143
    %v183 = vunpack.c.l.b16 %v144
    %v184 = vunpack.c.l.b16 %v145
    %v185 = vunpack.c.l.b16 %v146
    %v186 = vunpack.c.l.b16 %v147
    %v187 = vunpack.c.l.b16 %v148
    %v188 = vunpack.c.l.b16 %v149
    %v189 = vpack.c.b16 %v174, %v173
    %v190 = vpack.c.b16 %v176, %v175
    %v191 = vpack.c.b16 %v178, %v177
    %v192 = vpack.c.b16 %v180, %v179
    %v193 = vpack.c.b16 %v182, %v181
    %v194 = vpack.c.b16 %v184, %v183
    %v195 = vpack.c.b16 %v186, %v185
    %v196 = vpack.c.b16 %v188, %v187
    %205 = vmatprep.subr.bf16.mxu0 0
    %206 = vmatpush1.bf16.msra.mxu0 %v189
    %207 = vmatprep.subr.bf16.mxu0 0
    %208 = vmatpush1.bf16.msra.mxu0 %v190
    %209 = vmatprep.subr.bf16.mxu0 0
    %210 = vmatpush1.bf16.msra.mxu0 %v191
    %211 = vmatprep.subr.bf16.mxu0 0
    %212 = vmatpush1.bf16.msra.mxu0 %v192
    %213 = vmatprep.subr.bf16.mxu0 0
    %214 = vmatpush1.bf16.msra.mxu0 %v193
    %215 = vmatprep.subr.bf16.mxu0 0
    %216 = vmatpush1.bf16.msra.mxu0 %v194
    %217 = vmatprep.subr.bf16.mxu0 0
    %218 = vmatpush1.bf16.msra.mxu0 %v195
    %219 = vmatprep.subr.bf16.mxu0 0
    %220 = vmatpush1.bf16.msra.mxu0 %v196
    %221 = vmatprep.subr.bf16.mxu0 0
    %222 = vmatpush1.bf16.msra.mxu0 0
    %223 = vmatprep.subr.bf16.mxu0 0
    %224 = vmatpush1.bf16.msra.mxu0 0
    %225 = vmatprep.subr.bf16.mxu0 0
    %226 = vmatpush1.bf16.msra.mxu0 0
    %227 = vmatprep.subr.bf16.mxu0 0
    %228 = vmatpush1.bf16.msra.mxu0 0
    %229 = vmatprep.subr.bf16.mxu0 0
    %230 = vmatpush1.bf16.msra.mxu0 0
    %231 = vmatprep.subr.bf16.mxu0 0
    %232 = vmatpush1.bf16.msra.mxu0 0
    %233 = vmatprep.subr.bf16.mxu0 0
    %234 = vmatpush1.bf16.msra.mxu0 0
    %235 = vmatprep.subr.bf16.mxu0 0
    %236 = vmatpush1.bf16.msra.mxu0 0
    %237 = vmatprep.mubr.bf16.mxu0 0
    %238 = vmatmul.mubr.bf16.gmra.mrb[0].mxu0 %v133
    %v239 = vpop.f32.mrb[0].mxu0
    %v240 = vadd.f32 %v155, %v239
    %v241 = vpop.f32.mrb[0].mxu0
    %v242 = vpop.f32.mrb[0].mxu0
    %v243 = vpop.f32.mrb[0].mxu0
    %244 = vdwg.mxu0
    %v245 = vpack.c.bf16 %v240, %v240
    %v246 = vld [vmem:[#allocation7] sm:$0xff]
    %v247 = vld [vmem:[#allocation7 + $0x8] sm:$0xff]
    %v248 = vld [vmem:[#allocation7 + $0x10] sm:$0xff]
    %v249 = vld [vmem:[#allocation7 + $0x18] sm:$0xff]
    %v250 = vld [vmem:[#allocation7 + $0x20] sm:$0xff]
    %v251 = vld [vmem:[#allocation7 + $0x28] sm:$0xff]
    %v252 = vld [vmem:[#allocation7 + $0x30] sm:$0xff]
    %v253 = vld [vmem:[#allocation7 + $0x38] sm:$0xff]
    %v254 = vld [vmem:[#allocation7 + $0x40] sm:$0xff]
    %v255 = vld [vmem:[#allocation7 + $0x48] sm:$0xff]
    %v256 = vld [vmem:[#allocation7 + $0x50] sm:$0xff]
    %v257 = vld [vmem:[#allocation7 + $0x58] sm:$0xff]
    %v258 = vld [vmem:[#allocation7 + $0x60] sm:$0xff]
    %v259 = vld [vmem:[#allocation7 + $0x68] sm:$0xff]
    %v260 = vld [vmem:[#allocation7 + $0x70] sm:$0xff]
    %v261 = vld [vmem:[#allocation7 + $0x78] sm:$0xff]
    %v262 = vld [vmem:[%s4] sm:$0x3]
    %v264 = vlaneseq
    %v265 = vshrl.u32 %v264, 7
    %v266 = vsub.s32 0, %v265
    %v267 = vrot.slane %v262, %v266
    %v268 = vlaneseq
    %v269 = vshrl.u32 %v268, 7
    %v270 = vsub.s32 1, %v269
    %v271 = vrot.slane %v262, %v270
    %v290 = vunpack.c.l.b16 %v246
    %v291 = vunpack.c.h.b16 %v246
    %v292 = vunpack.c.l.b16 %v247
    %v293 = vunpack.c.h.b16 %v247
    %v294 = vunpack.c.l.b16 %v248
    %v295 = vunpack.c.h.b16 %v248
    %v296 = vunpack.c.l.b16 %v249
    %v297 = vunpack.c.h.b16 %v249
    %v298 = vunpack.c.l.b16 %v250
    %v299 = vunpack.c.h.b16 %v250
    %v300 = vunpack.c.l.b16 %v251
    %v301 = vunpack.c.h.b16 %v251
    %v302 = vunpack.c.l.b16 %v252
    %v303 = vunpack.c.h.b16 %v252
    %v304 = vunpack.c.l.b16 %v253
    %v305 = vunpack.c.h.b16 %v253
    %v306 = vunpack.c.l.b16 %v254
    %v307 = vunpack.c.h.b16 %v254
    %v308 = vunpack.c.l.b16 %v255
    %v309 = vunpack.c.h.b16 %v255
    %v310 = vunpack.c.l.b16 %v256
    %v311 = vunpack.c.h.b16 %v256
    %v312 = vunpack.c.l.b16 %v257
    %v313 = vunpack.c.h.b16 %v257
    %v314 = vunpack.c.l.b16 %v258
    %v315 = vunpack.c.h.b16 %v258
    %v316 = vunpack.c.l.b16 %v259
    %v317 = vunpack.c.h.b16 %v259
    %v318 = vunpack.c.l.b16 %v260
    %v319 = vunpack.c.h.b16 %v260
    %v320 = vunpack.c.l.b16 %v261
    %v321 = vunpack.c.h.b16 %v261
    %v322 = vpack.c.b16 %v292, %v290
    %v323 = vpack.c.b16 %v293, %v291
    %v324 = vpack.c.b16 %v296, %v294
    %v325 = vpack.c.b16 %v297, %v295
    %v326 = vpack.c.b16 %v300, %v298
    %v327 = vpack.c.b16 %v301, %v299
    %v328 = vpack.c.b16 %v304, %v302
    %v329 = vpack.c.b16 %v305, %v303
    %v330 = vpack.c.b16 %v308, %v306
    %v331 = vpack.c.b16 %v309, %v307
    %v332 = vpack.c.b16 %v312, %v310
    %v333 = vpack.c.b16 %v313, %v311
    %v334 = vpack.c.b16 %v316, %v314
    %v335 = vpack.c.b16 %v317, %v315
    %v336 = vpack.c.b16 %v320, %v318
    %v337 = vpack.c.b16 %v321, %v319
    %354 = vmatprep.subr.bf16.mxu0 %v323
    %355 = vmatpush1.bf16.msra.mxu0 %v322
    %356 = vmatprep.subr.bf16.mxu0 %v325
    %357 = vmatpush1.bf16.msra.mxu0 %v324
    %358 = vmatprep.subr.bf16.mxu0 %v327
    %359 = vmatpush1.bf16.msra.mxu0 %v326
    %360 = vmatprep.subr.bf16.mxu0 %v329
    %361 = vmatpush1.bf16.msra.mxu0 %v328
    %362 = vmatprep.subr.bf16.mxu0 %v331
    %363 = vmatpush1.bf16.msra.mxu0 %v330
    %364 = vmatprep.subr.bf16.mxu0 %v333
    %365 = vmatpush1.bf16.msra.mxu0 %v332
    %366 = vmatprep.subr.bf16.mxu0 %v335
    %367 = vmatpush1.bf16.msra.mxu0 %v334
    %368 = vmatprep.subr.bf16.mxu0 %v337
    %369 = vmatpush1.bf16.msra.mxu0 %v336
    %370 = vmatprep.subr.bf16.mxu0 0
    %371 = vmatpush1.bf16.msra.mxu0 0
    %372 = vmatprep.subr.bf16.mxu0 0
    %373 = vmatpush1.bf16.msra.mxu0 0
    %374 = vmatprep.subr.bf16.mxu0 0
    %375 = vmatpush1.bf16.msra.mxu0 0
    %376 = vmatprep.subr.bf16.mxu0 0
    %377 = vmatpush1.bf16.msra.mxu0 0
    %378 = vmatprep.subr.bf16.mxu0 0
    %379 = vmatpush1.bf16.msra.mxu0 0
    %380 = vmatprep.subr.bf16.mxu0 0
    %381 = vmatpush1.bf16.msra.mxu0 0
    %382 = vmatprep.subr.bf16.mxu0 0
    %383 = vmatpush1.bf16.msra.mxu0 0
    %384 = vmatprep.subr.bf16.mxu0 0
    %385 = vmatpush1.bf16.msra.mxu0 0
    %386 = vmatprep.mubr.bf16.mxu0 0
    %387 = vmatmul.mubr.bf16.gmra.mrb[0].mxu0 %v245
    %v388 = vpop.f32.mrb[0].mxu0
    %v389 = vadd.f32 %v267, %v388
    %v390 = vpop.f32.mrb[0].mxu0
    %v391 = vadd.f32 %v271, %v390
    %v392 = vpop.f32.mrb[0].mxu0
    %v393 = vpop.f32.mrb[0].mxu0
    %394 = vdwg.mxu0
    %v395 = vrot.slane %v389, 4
    %v396 = vadd.f32 %v389, %v395
    %v397 = vrot.slane %v396, 2
    %v398 = vadd.f32 %v396, %v397
    %v399 = vrot.slane %v398, 1
    %v400 = vadd.f32 %v398, %v399
    %v401 = vrot.slane %v391, 4
    %v402 = vadd.f32 %v391, %v401
    %v403 = vrot.slane %v402, 2
    %v404 = vadd.f32 %v402, %v403
    %v405 = vrot.slane %v404, 1
    %v406 = vadd.f32 %v404, %v405
    %v407 = vrcp.pop 8.0
    %v408 = vmul.f32 %v400, %v407
    %v409 = vmul.f32 %v406, %v407
    %v410 = vmul.f32 %v389, %v389
    %v411 = vmul.f32 %v391, %v391
    %v412 = vrot.slane %v410, 4
    %v413 = vadd.f32 %v410, %v412
    %v414 = vrot.slane %v413, 2
    %v415 = vadd.f32 %v413, %v414
    %v416 = vrot.slane %v415, 1
    %v417 = vadd.f32 %v415, %v416
    %v418 = vrot.slane %v411, 4
    %v419 = vadd.f32 %v411, %v418
    %v420 = vrot.slane %v419, 2
    %v421 = vadd.f32 %v419, %v420
    %v422 = vrot.slane %v421, 1
    %v423 = vadd.f32 %v421, %v422
    %v424 = vmul.f32 %v417, %v407
    %v425 = vmul.f32 %v423, %v407
    %v426 = vmul.f32 %v408, %v408
    %v427 = vmul.f32 %v409, %v409
    %v428 = vsub.f32 %v424, %v426
    %v429 = vsub.f32 %v425, %v427
    %v430 = vmax.f32 %v428, 0.0
    %v431 = vmax.f32 %v429, 0.0
    %v432 = vsub.f32 %v389, %v408
    %v433 = vsub.f32 %v391, %v409
    %v434 = vadd.f32 %v430, 1e-05
    %v435 = vadd.f32 %v431, 1e-05
    %v436 = vrsqrt.pop %v434
    %v437 = vrsqrt.pop %v435
    %v438 = vmul.f32 %v432, %v436
    %v439 = vmul.f32 %v433, %v437
    %v440 = vld [vmem:[%s5] sm:$0x3]
    %v442 = vlaneseq
    %v443 = vshrl.u32 %v442, 7
    %v444 = vsub.s32 0, %v443
    %v445 = vrot.slane %v440, %v444
    %v446 = vlaneseq
    %v447 = vshrl.u32 %v446, 7
    %v448 = vsub.s32 1, %v447
    %v449 = vrot.slane %v440, %v448
    %v452 = vmul.f32 %v445, %v438
    %v453 = vmul.f32 %v449, %v439
    %v454 = vld [vmem:[%s6] sm:$0x3]
    %v456 = vlaneseq
    %v457 = vshrl.u32 %v456, 7
    %v458 = vsub.s32 0, %v457
    %v459 = vrot.slane %v454, %v458
    %v460 = vlaneseq
    %v461 = vshrl.u32 %v460, 7
    %v462 = vsub.s32 1, %v461
    %v463 = vrot.slane %v454, %v462
    %v466 = vadd.f32 %v452, %v459
    %v467 = vadd.f32 %v453, %v463
    %v468 = vmax.f32 %v466, 0.0
    %v469 = vmax.f32 %v467, 0.0
    %v470 = vpack.c.bf16 %v468, %v468
    %v471 = vpack.c.bf16 %v469, %v469
    %v472 = vld [vmem:[#allocation8] sm:$0xf]
    %v473 = vld [vmem:[#allocation8 + $0x4] sm:$0xf]
    %v474 = vld [vmem:[#allocation8 + $0x8] sm:$0xf]
    %v475 = vld [vmem:[#allocation8 + $0xc] sm:$0xf]
    %v476 = vld [vmem:[#allocation8 + $0x10] sm:$0xf]
    %v477 = vld [vmem:[#allocation8 + $0x14] sm:$0xf]
    %v478 = vld [vmem:[#allocation8 + $0x18] sm:$0xf]
    %v479 = vld [vmem:[#allocation8 + $0x1c] sm:$0xf]
    %v480 = vld [vmem:[#allocation8 + $0x20] sm:$0xf]
    %v481 = vld [vmem:[#allocation8 + $0x24] sm:$0xf]
    %v482 = vld [vmem:[#allocation8 + $0x28] sm:$0xf]
    %v483 = vld [vmem:[#allocation8 + $0x2c] sm:$0xf]
    %v484 = vld [vmem:[#allocation8 + $0x30] sm:$0xf]
    %v485 = vld [vmem:[#allocation8 + $0x34] sm:$0xf]
    %v486 = vld [vmem:[#allocation8 + $0x38] sm:$0xf]
    %v487 = vld [vmem:[#allocation8 + $0x3c] sm:$0xf]
    %v488 = vld [vmem:[#allocation8 + $0x40] sm:$0xf]
    %v489 = vld [vmem:[#allocation8 + $0x44] sm:$0xf]
    %v490 = vld [vmem:[#allocation8 + $0x48] sm:$0xf]
    %v491 = vld [vmem:[#allocation8 + $0x4c] sm:$0xf]
    %v492 = vld [vmem:[#allocation8 + $0x50] sm:$0xf]
    %v493 = vld [vmem:[#allocation8 + $0x54] sm:$0xf]
    %v494 = vld [vmem:[#allocation8 + $0x58] sm:$0xf]
    %v495 = vld [vmem:[#allocation8 + $0x5c] sm:$0xf]
    %v496 = vld [vmem:[#allocation8 + $0x60] sm:$0xf]
    %v497 = vld [vmem:[#allocation8 + $0x64] sm:$0xf]
    %v498 = vld [vmem:[#allocation8 + $0x68] sm:$0xf]
    %v499 = vld [vmem:[#allocation8 + $0x6c] sm:$0xf]
    %v500 = vld [vmem:[#allocation8 + $0x70] sm:$0xf]
    %v501 = vld [vmem:[#allocation8 + $0x74] sm:$0xf]
    %v502 = vld [vmem:[#allocation8 + $0x78] sm:$0xf]
    %v503 = vld [vmem:[#allocation8 + $0x7c] sm:$0xf]
    %v504 = vld [vmem:[%s8] sm:$0x1]
    %v506 = vlaneseq
    %v507 = vshrl.u32 %v506, 7
    %v508 = vsub.s32 0, %v507
    %v509 = vrot.slane %v504, %v508
    %v543 = vunpack.c.l.b16 %v472
    %v544 = vunpack.c.l.b16 %v473
    %v545 = vunpack.c.l.b16 %v474
    %v546 = vunpack.c.l.b16 %v475
    %v547 = vunpack.c.l.b16 %v476
    %v548 = vunpack.c.l.b16 %v477
    %v549 = vunpack.c.l.b16 %v478
    %v550 = vunpack.c.l.b16 %v479
    %v551 = vunpack.c.l.b16 %v480
    %v552 = vunpack.c.l.b16 %v481
    %v553 = vunpack.c.l.b16 %v482
    %v554 = vunpack.c.l.b16 %v483
    %v555 = vunpack.c.l.b16 %v484
    %v556 = vunpack.c.l.b16 %v485
    %v557 = vunpack.c.l.b16 %v486
    %v558 = vunpack.c.l.b16 %v487
    %v559 = vunpack.c.l.b16 %v488
    %v560 = vunpack.c.l.b16 %v489
    %v561 = vunpack.c.l.b16 %v490
    %v562 = vunpack.c.l.b16 %v491
    %v563 = vunpack.c.l.b16 %v492
    %v564 = vunpack.c.l.b16 %v493
    %v565 = vunpack.c.l.b16 %v494
    %v566 = vunpack.c.l.b16 %v495
    %v567 = vunpack.c.l.b16 %v496
    %v568 = vunpack.c.l.b16 %v497
    %v569 = vunpack.c.l.b16 %v498
    %v570 = vunpack.c.l.b16 %v499
    %v571 = vunpack.c.l.b16 %v500
    %v572 = vunpack.c.l.b16 %v501
    %v573 = vunpack.c.l.b16 %v502
    %v574 = vunpack.c.l.b16 %v503
    %v575 = vpack.c.b16 %v544, %v543
    %v576 = vpack.c.b16 %v546, %v545
    %v577 = vpack.c.b16 %v548, %v547
    %v578 = vpack.c.b16 %v550, %v549
    %v579 = vpack.c.b16 %v552, %v551
    %v580 = vpack.c.b16 %v554, %v553
    %v581 = vpack.c.b16 %v556, %v555
    %v582 = vpack.c.b16 %v558, %v557
    %v583 = vpack.c.b16 %v560, %v559
    %v584 = vpack.c.b16 %v562, %v561
    %v585 = vpack.c.b16 %v564, %v563
    %v586 = vpack.c.b16 %v566, %v565
    %v587 = vpack.c.b16 %v568, %v567
    %v588 = vpack.c.b16 %v570, %v569
    %v589 = vpack.c.b16 %v572, %v571
    %v590 = vpack.c.b16 %v574, %v573
    %607 = vmatprep.subr.bf16.mxu0 0
    %608 = vmatpush1.bf16.msra.mxu0 %v575
    %609 = vmatprep.subr.bf16.mxu0 0
    %610 = vmatpush1.bf16.msra.mxu0 %v576
    %611 = vmatprep.subr.bf16.mxu0 0
    %612 = vmatpush1.bf16.msra.mxu0 %v577
    %613 = vmatprep.subr.bf16.mxu0 0
    %614 = vmatpush1.bf16.msra.mxu0 %v578
    %615 = vmatprep.subr.bf16.mxu0 0
    %616 = vmatpush1.bf16.msra.mxu0 %v579
    %617 = vmatprep.subr.bf16.mxu0 0
    %618 = vmatpush1.bf16.msra.mxu0 %v580
    %619 = vmatprep.subr.bf16.mxu0 0
    %620 = vmatpush1.bf16.msra.mxu0 %v581
    %621 = vmatprep.subr.bf16.mxu0 0
    %622 = vmatpush1.bf16.msra.mxu0 %v582
    %623 = vmatprep.subr.bf16.mxu0 0
    %624 = vmatpush1.bf16.msra.mxu0 %v583
    %625 = vmatprep.subr.bf16.mxu0 0
    %626 = vmatpush1.bf16.msra.mxu0 %v584
    %627 = vmatprep.subr.bf16.mxu0 0
    %628 = vmatpush1.bf16.msra.mxu0 %v585
    %629 = vmatprep.subr.bf16.mxu0 0
    %630 = vmatpush1.bf16.msra.mxu0 %v586
    %631 = vmatprep.subr.bf16.mxu0 0
    %632 = vmatpush1.bf16.msra.mxu0 %v587
    %633 = vmatprep.subr.bf16.mxu0 0
    %634 = vmatpush1.bf16.msra.mxu0 %v588
    %635 = vmatprep.subr.bf16.mxu0 0
    %636 = vmatpush1.bf16.msra.mxu0 %v589
    %637 = vmatprep.subr.bf16.mxu0 0
    %638 = vmatpush1.bf16.msra.mxu0 %v590
    %639 = vmatprep.mubr.bf16.mxu0 %v471
    %640 = vmatmul.mubr.bf16.gmra.mrb[0].mxu0 %v470
    %v641 = vpop.f32.mrb[0].mxu0
    %v642 = vadd.f32 %v509, %v641
    %v643 = vpop.f32.mrb[0].mxu0
    %v644 = vpop.f32.mrb[0].mxu0
    %v645 = vpop.f32.mrb[0].mxu0
    %646 = vdwg.mxu0
    %v647 = vpack.c.bf16 %v642, %v642
    %v648 = vld [vmem:[#allocation10] sm:$0xff]
    %v649 = vld [vmem:[#allocation10 + $0x8] sm:$0xff]
    %v650 = vld [vmem:[#allocation10 + $0x10] sm:$0xff]
    %v651 = vld [vmem:[#allocation10 + $0x18] sm:$0xff]
    %v652 = vld [vmem:[#allocation10 + $0x20] sm:$0xff]
    %v653 = vld [vmem:[#allocation10 + $0x28] sm:$0xff]
    %v654 = vld [vmem:[#allocation10 + $0x30] sm:$0xff]
    %v655 = vld [vmem:[#allocation10 + $0x38] sm:$0xff]
    %v656 = vld [vmem:[#allocation10 + $0x40] sm:$0xff]
    %v657 = vld [vmem:[#allocation10 + $0x48] sm:$0xff]
    %v658 = vld [vmem:[#allocation10 + $0x50] sm:$0xff]
    %v659 = vld [vmem:[#allocation10 + $0x58] sm:$0xff]
    %v660 = vld [vmem:[#allocation10 + $0x60] sm:$0xff]
    %v661 = vld [vmem:[#allocation10 + $0x68] sm:$0xff]
    %v662 = vld [vmem:[#allocation10 + $0x70] sm:$0xff]
    %v663 = vld [vmem:[#allocation10 + $0x78] sm:$0xff]
    %v664 = vld [vmem:[%s10] sm:$0x3]
    %v666 = vlaneseq
    %v667 = vshrl.u32 %v666, 7
    %v668 = vsub.s32 0, %v667
    %v669 = vrot.slane %v664, %v668
    %v670 = vlaneseq
    %v671 = vshrl.u32 %v670, 7
    %v672 = vsub.s32 1, %v671
    %v673 = vrot.slane %v664, %v672
    %v692 = vunpack.c.l.b16 %v648
    %v693 = vunpack.c.h.b16 %v648
    %v694 = vunpack.c.l.b16 %v649
    %v695 = vunpack.c.h.b16 %v649
    %v696 = vunpack.c.l.b16 %v650
    %v697 = vunpack.c.h.b16 %v650
    %v698 = vunpack.c.l.b16 %v651
    %v699 = vunpack.c.h.b16 %v651
    %v700 = vunpack.c.l.b16 %v652
    %v701 = vunpack.c.h.b16 %v652
    %v702 = vunpack.c.l.b16 %v653
    %v703 = vunpack.c.h.b16 %v653
    %v704 = vunpack.c.l.b16 %v654
    %v705 = vunpack.c.h.b16 %v654
    %v706 = vunpack.c.l.b16 %v655
    %v707 = vunpack.c.h.b16 %v655
    %v708 = vunpack.c.l.b16 %v656
    %v709 = vunpack.c.h.b16 %v656
    %v710 = vunpack.c.l.b16 %v657
    %v711 = vunpack.c.h.b16 %v657
    %v712 = vunpack.c.l.b16 %v658
    %v713 = vunpack.c.h.b16 %v658
    %v714 = vunpack.c.l.b16 %v659
    %v715 = vunpack.c.h.b16 %v659
    %v716 = vunpack.c.l.b16 %v660
    %v717 = vunpack.c.h.b16 %v660
    %v718 = vunpack.c.l.b16 %v661
    %v719 = vunpack.c.h.b16 %v661
    %v720 = vunpack.c.l.b16 %v662
    %v721 = vunpack.c.h.b16 %v662
    %v722 = vunpack.c.l.b16 %v663
    %v723 = vunpack.c.h.b16 %v663
    %v724 = vpack.c.b16 %v694, %v692
    %v725 = vpack.c.b16 %v695, %v693
    %v726 = vpack.c.b16 %v698, %v696
    %v727 = vpack.c.b16 %v699, %v697
    %v728 = vpack.c.b16 %v702, %v700
    %v729 = vpack.c.b16 %v703, %v701
    %v730 = vpack.c.b16 %v706, %v704
    %v731 = vpack.c.b16 %v707, %v705
    %v732 = vpack.c.b16 %v710, %v708
    %v733 = vpack.c.b16 %v711, %v709
    %v734 = vpack.c.b16 %v714, %v712
    %v735 = vpack.c.b16 %v715, %v713
    %v736 = vpack.c.b16 %v718, %v716
    %v737 = vpack.c.b16 %v719, %v717
    %v738 = vpack.c.b16 %v722, %v720
    %v739 = vpack.c.b16 %v723, %v721
    %756 = vmatprep.subr.bf16.mxu0 %v725
    %757 = vmatpush1.bf16.msra.mxu0 %v724
    %758 = vmatprep.subr.bf16.mxu0 %v727
    %759 = vmatpush1.bf16.msra.mxu0 %v726
    %760 = vmatprep.subr.bf16.mxu0 %v729
    %761 = vmatpush1.bf16.msra.mxu0 %v728
    %762 = vmatprep.subr.bf16.mxu0 %v731
    %763 = vmatpush1.bf16.msra.mxu0 %v730
    %764 = vmatprep.subr.bf16.mxu0 %v733
    %765 = vmatpush1.bf16.msra.mxu0 %v732
    %766 = vmatprep.subr.bf16.mxu0 %v735
    %767 = vmatpush1.bf16.msra.mxu0 %v734
    %768 = vmatprep.subr.bf16.mxu0 %v737
    %769 = vmatpush1.bf16.msra.mxu0 %v736
    %770 = vmatprep.subr.bf16.mxu0 %v739
    %771 = vmatpush1.bf16.msra.mxu0 %v738
    %772 = vmatprep.subr.bf16.mxu0 0
    %773 = vmatpush1.bf16.msra.mxu0 0
    %774 = vmatprep.subr.bf16.mxu0 0
    %775 = vmatpush1.bf16.msra.mxu0 0
    %776 = vmatprep.subr.bf16.mxu0 0
    %777 = vmatpush1.bf16.msra.mxu0 0
    %778 = vmatprep.subr.bf16.mxu0 0
    %779 = vmatpush1.bf16.msra.mxu0 0
    %780 = vmatprep.subr.bf16.mxu0 0
    %781 = vmatpush1.bf16.msra.mxu0 0
    %782 = vmatprep.subr.bf16.mxu0 0
    %783 = vmatpush1.bf16.msra.mxu0 0
    %784 = vmatprep.subr.bf16.mxu0 0
    %785 = vmatpush1.bf16.msra.mxu0 0
    %786 = vmatprep.subr.bf16.mxu0 0
    %787 = vmatpush1.bf16.msra.mxu0 0
    %788 = vmatprep.mubr.bf16.mxu0 0
    %789 = vmatmul.mubr.bf16.gmra.mrb[0].mxu0 %v647
    %v790 = vpop.f32.mrb[0].mxu0
    %v791 = vadd.f32 %v669, %v790
    %v792 = vpop.f32.mrb[0].mxu0
    %v793 = vadd.f32 %v673, %v792
    %v794 = vpop.f32.mrb[0].mxu0
    %v795 = vpop.f32.mrb[0].mxu0
    %796 = vdwg.mxu0
    %v797 = vrot.slane %v791, 4
    %v798 = vadd.f32 %v791, %v797
    %v799 = vrot.slane %v798, 2
    %v800 = vadd.f32 %v798, %v799
    %v801 = vrot.slane %v800, 1
    %v802 = vadd.f32 %v800, %v801
    %v803 = vrot.slane %v793, 4
    %v804 = vadd.f32 %v793, %v803
    %v805 = vrot.slane %v804, 2
    %v806 = vadd.f32 %v804, %v805
    %v807 = vrot.slane %v806, 1
    %v808 = vadd.f32 %v806, %v807
    %v809 = vmul.f32 %v802, %v407
    %v810 = vmul.f32 %v808, %v407
    %v811 = vmul.f32 %v791, %v791
    %v812 = vmul.f32 %v793, %v793
    %v813 = vrot.slane %v811, 4
    %v814 = vadd.f32 %v811, %v813
    %v815 = vrot.slane %v814, 2
    %v816 = vadd.f32 %v814, %v815
    %v817 = vrot.slane %v816, 1
    %v818 = vadd.f32 %v816, %v817
    %v819 = vrot.slane %v812, 4
    %v820 = vadd.f32 %v812, %v819
    %v821 = vrot.slane %v820, 2
    %v822 = vadd.f32 %v820, %v821
    %v823 = vrot.slane %v822, 1
    %v824 = vadd.f32 %v822, %v823
    %v825 = vmul.f32 %v818, %v407
    %v826 = vmul.f32 %v824, %v407
    %v827 = vmul.f32 %v809, %v809
    %v828 = vmul.f32 %v810, %v810
    %v829 = vsub.f32 %v825, %v827
    %v830 = vsub.f32 %v826, %v828
    %v831 = vmax.f32 %v829, 0.0
    %v832 = vmax.f32 %v830, 0.0
    %v833 = vsub.f32 %v791, %v809
    %v834 = vsub.f32 %v793, %v810
    %v835 = vadd.f32 %v831, 1e-05
    %v836 = vadd.f32 %v832, 1e-05
    %v837 = vrsqrt.pop %v835
    %v838 = vrsqrt.pop %v836
    %v839 = vmul.f32 %v833, %v837
    %v840 = vmul.f32 %v834, %v838
    %v841 = vld [vmem:[%s11] sm:$0x3]
    %v843 = vlaneseq
    %v844 = vshrl.u32 %v843, 7
    %v845 = vsub.s32 0, %v844
    %v846 = vrot.slane %v841, %v845
    %v847 = vlaneseq
    %v848 = vshrl.u32 %v847, 7
    %v849 = vsub.s32 1, %v848
    %v850 = vrot.slane %v841, %v849
    %v853 = vmul.f32 %v846, %v839
    %v854 = vmul.f32 %v850, %v840
    %v855 = vld [vmem:[%s12] sm:$0x3]
    %v857 = vlaneseq
    %v858 = vshrl.u32 %v857, 7
    %v859 = vsub.s32 0, %v858
    %v860 = vrot.slane %v855, %v859
    %v861 = vlaneseq
    %v862 = vshrl.u32 %v861, 7
    %v863 = vsub.s32 1, %v862
    %v864 = vrot.slane %v855, %v863
    %v867 = vadd.f32 %v853, %v860
    %v868 = vadd.f32 %v854, %v864
    %v869 = vmax.f32 %v867, 0.0
    %v870 = vmax.f32 %v868, 0.0
    %v871 = vpack.c.bf16 %v869, %v869
    %v872 = vpack.c.bf16 %v870, %v870
    %v873 = vld [vmem:[#allocation11] sm:$0xf]
    %v874 = vld [vmem:[#allocation11 + $0x4] sm:$0xf]
    %v875 = vld [vmem:[#allocation11 + $0x8] sm:$0xf]
    %v876 = vld [vmem:[#allocation11 + $0xc] sm:$0xf]
    %v877 = vld [vmem:[#allocation11 + $0x10] sm:$0xf]
    %v878 = vld [vmem:[#allocation11 + $0x14] sm:$0xf]
    %v879 = vld [vmem:[#allocation11 + $0x18] sm:$0xf]
    %v880 = vld [vmem:[#allocation11 + $0x1c] sm:$0xf]
    %v881 = vld [vmem:[#allocation11 + $0x20] sm:$0xf]
    %v882 = vld [vmem:[#allocation11 + $0x24] sm:$0xf]
    %v883 = vld [vmem:[#allocation11 + $0x28] sm:$0xf]
    %v884 = vld [vmem:[#allocation11 + $0x2c] sm:$0xf]
    %v885 = vld [vmem:[#allocation11 + $0x30] sm:$0xf]
    %v886 = vld [vmem:[#allocation11 + $0x34] sm:$0xf]
    %v887 = vld [vmem:[#allocation11 + $0x38] sm:$0xf]
    %v888 = vld [vmem:[#allocation11 + $0x3c] sm:$0xf]
    %v889 = vld [vmem:[#allocation11 + $0x40] sm:$0xf]
    %v890 = vld [vmem:[#allocation11 + $0x44] sm:$0xf]
    %v891 = vld [vmem:[#allocation11 + $0x48] sm:$0xf]
    %v892 = vld [vmem:[#allocation11 + $0x4c] sm:$0xf]
    %v893 = vld [vmem:[#allocation11 + $0x50] sm:$0xf]
    %v894 = vld [vmem:[#allocation11 + $0x54] sm:$0xf]
    %v895 = vld [vmem:[#allocation11 + $0x58] sm:$0xf]
    %v896 = vld [vmem:[#allocation11 + $0x5c] sm:$0xf]
    %v897 = vld [vmem:[#allocation11 + $0x60] sm:$0xf]
    %v898 = vld [vmem:[#allocation11 + $0x64] sm:$0xf]
    %v899 = vld [vmem:[#allocation11 + $0x68] sm:$0xf]
    %v900 = vld [vmem:[#allocation11 + $0x6c] sm:$0xf]
    %v901 = vld [vmem:[#allocation11 + $0x70] sm:$0xf]
    %v902 = vld [vmem:[#allocation11 + $0x74] sm:$0xf]
    %v903 = vld [vmem:[#allocation11 + $0x78] sm:$0xf]
    %v904 = vld [vmem:[#allocation11 + $0x7c] sm:$0xf]
    %v905 = vld [vmem:[%s14] sm:$0x1]
    %v907 = vlaneseq
    %v908 = vshrl.u32 %v907, 7
    %v909 = vsub.s32 0, %v908
    %v910 = vrot.slane %v905, %v909
    %v944 = vunpack.c.l.b16 %v873
    %v945 = vunpack.c.l.b16 %v874
    %v946 = vunpack.c.l.b16 %v875
    %v947 = vunpack.c.l.b16 %v876
    %v948 = vunpack.c.l.b16 %v877
    %v949 = vunpack.c.l.b16 %v878
    %v950 = vunpack.c.l.b16 %v879
    %v951 = vunpack.c.l.b16 %v880
    %v952 = vunpack.c.l.b16 %v881
    %v953 = vunpack.c.l.b16 %v882
    %v954 = vunpack.c.l.b16 %v883
    %v955 = vunpack.c.l.b16 %v884
    %v956 = vunpack.c.l.b16 %v885
    %v957 = vunpack.c.l.b16 %v886
    %v958 = vunpack.c.l.b16 %v887
    %v959 = vunpack.c.l.b16 %v888
    %v960 = vunpack.c.l.b16 %v889
    %v961 = vunpack.c.l.b16 %v890
    %v962 = vunpack.c.l.b16 %v891
    %v963 = vunpack.c.l.b16 %v892
    %v964 = vunpack.c.l.b16 %v893
    %v965 = vunpack.c.l.b16 %v894
    %v966 = vunpack.c.l.b16 %v895
    %v967 = vunpack.c.l.b16 %v896
    %v968 = vunpack.c.l.b16 %v897
    %v969 = vunpack.c.l.b16 %v898
    %v970 = vunpack.c.l.b16 %v899
    %v971 = vunpack.c.l.b16 %v900
    %v972 = vunpack.c.l.b16 %v901
    %v973 = vunpack.c.l.b16 %v902
    %v974 = vunpack.c.l.b16 %v903
    %v975 = vunpack.c.l.b16 %v904
    %v976 = vpack.c.b16 %v945, %v944
    %v977 = vpack.c.b16 %v947, %v946
    %v978 = vpack.c.b16 %v949, %v948
    %v979 = vpack.c.b16 %v951, %v950
    %v980 = vpack.c.b16 %v953, %v952
    %v981 = vpack.c.b16 %v955, %v954
    %v982 = vpack.c.b16 %v957, %v956
    %v983 = vpack.c.b16 %v959, %v958
    %v984 = vpack.c.b16 %v961, %v960
    %v985 = vpack.c.b16 %v963, %v962
    %v986 = vpack.c.b16 %v965, %v964
    %v987 = vpack.c.b16 %v967, %v966
    %v988 = vpack.c.b16 %v969, %v968
    %v989 = vpack.c.b16 %v971, %v970
    %v990 = vpack.c.b16 %v973, %v972
    %v991 = vpack.c.b16 %v975, %v974
    %1008 = vmatprep.subr.bf16.mxu0 0
    %1009 = vmatpush1.bf16.msra.mxu0 %v976
    %1010 = vmatprep.subr.bf16.mxu0 0
    %1011 = vmatpush1.bf16.msra.mxu0 %v977
    %1012 = vmatprep.subr.bf16.mxu0 0
    %1013 = vmatpush1.bf16.msra.mxu0 %v978
    %1014 = vmatprep.subr.bf16.mxu0 0
    %1015 = vmatpush1.bf16.msra.mxu0 %v979
    %1016 = vmatprep.subr.bf16.mxu0 0
    %1017 = vmatpush1.bf16.msra.mxu0 %v980
    %1018 = vmatprep.subr.bf16.mxu0 0
    %1019 = vmatpush1.bf16.msra.mxu0 %v981
    %1020 = vmatprep.subr.bf16.mxu0 0
    %1021 = vmatpush1.bf16.msra.mxu0 %v982
    %1022 = vmatprep.subr.bf16.mxu0 0
    %1023 = vmatpush1.bf16.msra.mxu0 %v983
    %1024 = vmatprep.subr.bf16.mxu0 0
    %1025 = vmatpush1.bf16.msra.mxu0 %v984
    %1026 = vmatprep.subr.bf16.mxu0 0
    %1027 = vmatpush1.bf16.msra.mxu0 %v985
    %1028 = vmatprep.subr.bf16.mxu0 0
    %1029 = vmatpush1.bf16.msra.mxu0 %v986
    %1030 = vmatprep.subr.bf16.mxu0 0
    %1031 = vmatpush1.bf16.msra.mxu0 %v987
    %1032 = vmatprep.subr.bf16.mxu0 0
    %1033 = vmatpush1.bf16.msra.mxu0 %v988
    %1034 = vmatprep.subr.bf16.mxu0 0
    %1035 = vmatpush1.bf16.msra.mxu0 %v989
    %1036 = vmatprep.subr.bf16.mxu0 0
    %1037 = vmatpush1.bf16.msra.mxu0 %v990
    %1038 = vmatprep.subr.bf16.mxu0 0
    %1039 = vmatpush1.bf16.msra.mxu0 %v991
    %1040 = vmatprep.mubr.bf16.mxu0 %v872
    %1041 = vmatmul.mubr.bf16.gmra.mrb[0].mxu0 %v871
    %v1042 = vpop.f32.mrb[0].mxu0
    %v1043 = vadd.f32 %v910, %v1042
    %v1044 = vpop.f32.mrb[0].mxu0
    %v1045 = vpop.f32.mrb[0].mxu0
    %v1046 = vpop.f32.mrb[0].mxu0
    %1047 = vdwg.mxu0
    %v1048 = vmul.f32 %v1043, %v1043
    %1049 = vadd.xlane.f32.xlu0 %v1048
    %v1050 = vpop.xlane.xlu0 %1049
    %v1051 = vmax.f32 %v1050, 1e-24
    %v1052 = vrsqrt.pop %v1051
    %v1053 = vmul.f32 %v1043, %v1052
    %v1054 = vmul.f32 %v642, %v642
    %1055 = vadd.xlane.f32.xlu0 %v1054
    %v1056 = vpop.xlane.xlu0 %1055
    %v1057 = vmax.f32 %v1056, 1e-24
    %v1058 = vrsqrt.pop %v1057
    %v1059 = vmul.f32 %v642, %v1058
    %v1060 = vmul.f32 %v1053, %v1059
    %1061 = vadd.xlane.f32.xlu0 %v1060
    %v1062 = vpop.xlane.xlu0 %1061
    %v1063 = vmul.f32 %v1062, 2.0
    %v1064 = vsub.f32 2.0, %v1063
    %vm1065 = vcmask 7168
    %v1066 = vsel %vm1065, %v1064, 0.0
    %1067 = vadd.xlane.f32.xlu0 %v1066
    %v1068 = vpop.xlane.xlu0 %1067
    %v1069 = vrot.slane %v1068, 4
    %v1070 = vadd.f32 %v1068, %v1069
    %v1071 = vrot.slane %v1070, 2
    %v1072 = vadd.f32 %v1070, %v1071
    %v1073 = vrot.slane %v1072, 1
    %v1074 = vadd.f32 %v1072, %v1073
    %s1075 = vtos %v1074
    %v1076 = vrcp.pop 8.0
    %s1077 = vtos %v1076
    %s1078 = smul.f32 %s1075, %s1077
    %s1079 = smul.f32 %s1078, 2.0
    %v1080 = vstv %s1079
    %vm1081 = vcmask 0
    %1082 = vst.msk [vmem:[#allocation13] sm:$0x1] %vm1081, %v1080
    // Predicated region
    $region86: #{byol_forward.1} parent=1 // pred_check
      _
    $region87: #{byol_forward.1} parent=1 // pred_check_branch
      %1084 = sbr.rel (0) target = $region89
    $region88: #{byol_forward.1} parent=1 // pred_region
      %s1086 = ssub.s32 16, 16
      %1087 = vsyncadd [#allocation4], %s1086
      %s1089 = sshll.u32 [#allocation13], 4
      %s1090 = int_to_ptr.vmem [resolvable:$true] %s1089
      %1092 = dma.vmem_to_hbm [thread:$0]  %s1090, 16, %s15, [#allocation4]
    $region89: #{byol_forward.1} parent=1 // pred_fallthru
      _
    // Predicated region
    $region90: #{byol_forward.1} parent=1 // pred_check
      _
    $region91: #{byol_forward.1} parent=1 // pred_check_branch
      %1094 = sbr.rel (0) target = $region93
    $region92: #{byol_forward.1} parent=1 // pred_region
      %1095 = dma.done [#allocation4], 16
    $region93: #{byol_forward.1} parent=1 // pred_fallthru
      _
    %1096 = vsyncpa [#allocation3], 1
    %1097 = vsyncpa [#allocation6], 1
    %1098 = vsyncpa [#allocation9], 1
    %1099 = vsyncpa [#allocation12], 1
    %1100 = vsyncpa [#allocation4], 1

</llo_original>
